<compile_context>
chip_gen: v6e
topology: v6e:2x2x1
jax: 0.10.0
libtpu: 0.0.40
codegen_flags: <defaults>
</compile_context>

<pallas_src>
import jax
import jax.numpy as jnp
from jax.experimental import pallas as pl
from jax.experimental.pallas import tpu as pltpu

_LANE = 128
_VMEM_TILE_BUDGET = 16 * 1024 * 1024  # bytes for (x + out) x 2 pipeline buffers


def _bias_kernel(x_ref, beta_ref, o_ref):
    # x_ref: (tile_rows, C) block in VMEM; beta_ref: (1, C), resident across
    # all grid steps (index_map always (0, 0)). Sublane-broadcast VPU add.
    o_ref[...] = x_ref[...] + beta_ref[...]


def _bias_add_2d(x: jax.Array, beta2d: jax.Array, *, tile_rows: int) -> jax.Array:
    """x: (n, c), beta2d: (1, c) -> x + beta2d, batch-tiled over a 1-D grid."""
    n, c = x.shape
    itemsize = jnp.dtype(x.dtype).itemsize
    sub = 32 // itemsize  # sublane packing: 8 (f32), 16 (bf16), 32 (int8/fp8)

    # Largest tile that keeps 2 double-buffered (tile, c) blocks (x + out)
    # under the VMEM budget; cap by requested tile_rows and by n itself.
    max_rows = max(sub, _VMEM_TILE_BUDGET // max(1, 4 * c * itemsize))
    tn = min(tile_rows, n, max_rows)
    if tn >= n:
        tn = n                              # full extent: no alignment needed
    else:
        tn = max(sub, (tn // sub) * sub)    # keep sublane-packing alignment

    grid = (pl.cdiv(n, tn),)
    return pl.pallas_call(
        _bias_kernel,
        out_shape=jax.ShapeDtypeStruct((n, c), x.dtype),
        grid_spec=pltpu.PrefetchScalarGridSpec(
            num_scalar_prefetch=0,
            grid=grid,
            in_specs=[
                pl.BlockSpec((tn, c), lambda i: (i, 0)),
                pl.BlockSpec((1, c), lambda i: (0, 0)),  # beta stays resident
            ],
            out_specs=pl.BlockSpec((tn, c), lambda i: (i, 0)),
        ),
        compiler_params=pltpu.CompilerParams(
            # Independent iterations -> shard across both TCs on v7x.
            dimension_semantics=("parallel",),
            vmem_limit_bytes=32 << 20,
        ),
    )(x, beta2d)


def bias_layer_forward(x: jax.Array, beta: jax.Array, *, tile_rows: int = 1024) -> jax.Array:
    """Computes x + beta with beta of shape (num_classes,) broadcast over batch."""
    n, c = x.shape
    beta = beta.astype(x.dtype)

    # Lane-dense path: when the class dim is narrower than a vreg lane row,
    # fold (n, c) -> (n*c/128, 128) and tile beta across the 128 lanes so the
    # kernel emits full-width (unmasked) stores.
    if c < _LANE and _LANE % c == 0 and (n * c) % _LANE == 0:
        rows = (n * c) // _LANE
        x2 = x.reshape(rows, _LANE)
        beta2d = jnp.tile(beta, _LANE // c).reshape(1, _LANE)
        out2 = _bias_add_2d(x2, beta2d, tile_rows=tile_rows)
        return out2.reshape(n, c)

    # Direct path: class dim already lane-friendly (or not foldable).
    beta2d = beta.reshape(1, c)
    return _bias_add_2d(x, beta2d, tile_rows=tile_rows)


if __name__ == "__main__":
    key = jax.random.PRNGKey(0)

    # --- Case 1: module-faithful small shape (batch, num_classes) = (8, 32),
    #     beta initialized to zeros exactly as in BiasLayer.__init__.
    batch, num_classes = 8, 32
    k1, k2, k3 = jax.random.split(key, 3)
    x = jax.random.normal(k1, (batch, num_classes), dtype=jnp.float32)
    beta0 = jnp.zeros((num_classes,), dtype=jnp.float32)

    out = jax.block_until_ready(bias_layer_forward(x, beta0))
    ref = x + beta0[None, :]
    assert out.shape == (batch, num_classes)
    assert jnp.allclose(out, ref, atol=1e-6), "mismatch vs reference (zero beta)"

    # --- Case 2: nonzero beta on the lane-dense path (C=32 folded to 128 lanes).
    beta_nz = jax.random.normal(k2, (num_classes,), dtype=jnp.float32)
    out_nz = jax.block_until_ready(bias_layer_forward(x, beta_nz))
    ref_nz = x + beta_nz[None, :]
    assert jnp.allclose(out_nz, ref_nz, atol=1e-6), "mismatch vs reference (lane-dense)"

    # --- Case 3: lane-aligned C with a multi-step grid (direct path, tiled batch).
    n_big, c_big = 512, 256
    x_big = jax.random.normal(k3, (n_big, c_big), dtype=jnp.float32)
    beta_big = jnp.arange(c_big, dtype=jnp.float32) * 0.01
    out_big = jax.block_until_ready(bias_layer_forward(x_big, beta_big, tile_rows=128))
    ref_big = x_big + beta_big[None, :]
    assert jnp.allclose(out_big, ref_big, atol=1e-6), "mismatch vs reference (tiled grid)"

    print("KERNEL_OK")
</pallas_src>

<mosaic_0001>
module attributes {stable_mosaic.version = 11 : i64} {
  func.func @_bias_kernel(%arg0: i32, %arg1: memref<2x128xf32, #tpu.memory_space<vmem>>, %arg2: memref<1x128xf32, #tpu.memory_space<vmem>>, %arg3: memref<2x128xf32, #tpu.memory_space<vmem>>) attributes {dimension_semantics = [#tpu.dimension_semantics<parallel>], iteration_bounds = array<i64: 1>, scalar_prefetch = 0 : i64, scratch_operands = 0 : i64, tpu.core_type = #tpu.core_type<tc>, window_params = [{transform_indices = @transform_0, window_bounds = array<i64: 2, 128>}, {pipeline_mode = #tpu.pipeline_mode<synchronous>, transform_indices = @transform_1, window_bounds = array<i64: 1, 128>}, {transform_indices = @transform_2, window_bounds = array<i64: 2, 128>}]} {
    %c0 = arith.constant 0 : index
    %c0_0 = arith.constant 0 : index
    %0 = vector.load %arg1[%c0, %c0_0] : memref<2x128xf32, #tpu.memory_space<vmem>>, vector<2x128xf32>
    %c0_1 = arith.constant 0 : index
    %c0_2 = arith.constant 0 : index
    %1 = vector.load %arg2[%c0_1, %c0_2] : memref<1x128xf32, #tpu.memory_space<vmem>>, vector<1x128xf32>
    %2 = vector.broadcast %1 : vector<1x128xf32> to vector<2x128xf32>
    %3 = arith.addf %0, %2 : vector<2x128xf32>
    %c0_3 = arith.constant 0 : index
    %c0_4 = arith.constant 0 : index
    %4 = vector.load %arg3[%c0_3, %c0_4] : memref<2x128xf32, #tpu.memory_space<vmem>>, vector<2x128xf32>
    tpu.vector_store %arg3[%c0_3, %c0_4], %3 {strides = array<i32>} : memref<2x128xf32, #tpu.memory_space<vmem>>, vector<2x128xf32>,
    return
  }
  func.func @transform_0(%arg0: i32) -> (i32, i32) {
    %c0_i32 = arith.constant 0 : i32
    %c0_i32_0 = arith.constant 0 : i32
    return %arg0, %c0_i32 : i32, i32
  }
  func.func @transform_1(%arg0: i32) -> (i32, i32) {
    %c0_i32 = arith.constant 0 : i32
    %c0_i32_0 = arith.constant 0 : i32
    %c0_i32_1 = arith.constant 0 : i32
    return %c0_i32, %c0_i32_0 : i32, i32
  }
  func.func @transform_2(%arg0: i32) -> (i32, i32) {
    %c0_i32 = arith.constant 0 : i32
    %c0_i32_0 = arith.constant 0 : i32
    return %arg0, %c0_i32 : i32, i32
  }
}

</mosaic_0001>

<llo_original>
// kernel: tpu_custom_call.1
$region0: #{tpu_custom_call.1}
  #allocation0 [shape = 'u32[]', space=smem, size = 0x4, offset = 0x4, fixed_abs, tag = 'smem constant byte address 0x4 - core index']
  #allocation1 [shape = 'u32[144,128]{1,0:T(1,128)}', space=vmem, size = 0x12000, scoped, tag = 'internal scratch']
  %s0 = inlined_call_operand.hbm [shape: f32[2,128], index: 0, kind: input, shape index: {}]
  %s1 = inlined_call_operand.vmem [shape: f32[1,128], index: 1, kind: input, shape index: {}]
  %s2 = inlined_call_operand.hbm [shape: f32[2,128], index: 2, kind: output, shape index: {}]
  %s3 = sld [smem:[#allocation0]]
  $region22: #{tpu_custom_call.1} parent=0
    _
  %s5 = ssub.s32 1, %s3
  %s6 = scalar_select 0, %s5, %s3
  $region1: #{tpu_custom_call.1} parent=0
    #allocation2 [shape = 'u8[1024]{0}', space=vmem, size = 0x400, scoped, tag = 'input window, operand 0, single buffered']
    #allocation3 [shape = 's32[1]{0}', space=sflag, size = 0x4, scoped, tag = 'scoped memory for tpu_custom_call.1']
    #allocation4 [shape = 's32[1]{0}', space=sflag, size = 0x4, scoped, tag = 'scoped memory for tpu_custom_call.1']
    #allocation5 [shape = 'u8[1024]{0}', space=vmem, size = 0x400, scoped, tag = 'output window, operand 0, single buffered']
    %7 = vsyncpa [#allocation3], 0
    %8 = vsyncpa [#allocation4], 0
    // Predicated region
    $region2: #{tpu_custom_call.1} parent=1 // pred_check
      _
    $region3: #{tpu_custom_call.1} parent=1 // pred_check_branch
      %10 = sbr.rel (0) target = $region5
    $region4: #{tpu_custom_call.1} parent=1 // pred_region
      %s12 = ssub.s32 32, 32
      %13 = vsyncadd [#allocation3], %s12
      %s15 = sshll.u32 [#allocation2], 4
      %s16 = int_to_ptr.vmem [resolvable:$true] %s15
      %18 = dma.hbm_to_vmem [thread:$0]  %s0, 32, %s16, [#allocation3]
    $region5: #{tpu_custom_call.1} parent=1 // pred_fallthru
      _
    // Predicated region
    $region6: #{tpu_custom_call.1} parent=1 // pred_check
      _
    $region7: #{tpu_custom_call.1} parent=1 // pred_check_branch
      %20 = sbr.rel (0) target = $region9
    $region8: #{tpu_custom_call.1} parent=1 // pred_region
      _
    $region9: #{tpu_custom_call.1} parent=1 // pred_fallthru
      _
    // Predicated region
    $region10: #{tpu_custom_call.1} parent=1 // pred_check
      _
    $region11: #{tpu_custom_call.1} parent=1 // pred_check_branch
      %22 = sbr.rel (0) target = $region13
    $region12: #{tpu_custom_call.1} parent=1 // pred_region
      %23 = dma.done [#allocation3], 32
    $region13: #{tpu_custom_call.1} parent=1 // pred_fallthru
      _
    %v24 = vld [vmem:[#allocation2] sm:$0x3]
    %v25 = vld [vmem:[%s1] sm:$0x1]
    %v27 = vlaneseq
    %v28 = vshrl.u32 %v27, 7
    %v29 = vsub.s32 0, %v28
    %v30 = vrot.slane %v25, %v29
    %v32 = vadd.f32 %v24, %v30
    %33 = vst [vmem:[#allocation5] sm:$0x3] %v32
    // Predicated region
    $region14: #{tpu_custom_call.1} parent=1 // pred_check
      _
    $region15: #{tpu_custom_call.1} parent=1 // pred_check_branch
      %35 = sbr.rel (0) target = $region17
    $region16: #{tpu_custom_call.1} parent=1 // pred_region
      %s37 = ssub.s32 32, 32
      %38 = vsyncadd [#allocation4], %s37
      %s40 = sshll.u32 [#allocation5], 4
      %s41 = int_to_ptr.vmem [resolvable:$true] %s40
      %43 = dma.vmem_to_hbm [thread:$0]  %s41, 32, %s2, [#allocation4]
    $region17: #{tpu_custom_call.1} parent=1 // pred_fallthru
      _
    // Predicated region
    $region18: #{tpu_custom_call.1} parent=1 // pred_check
      _
    $region19: #{tpu_custom_call.1} parent=1 // pred_check_branch
      %45 = sbr.rel (0) target = $region21
    $region20: #{tpu_custom_call.1} parent=1 // pred_region
      %46 = dma.done [#allocation4], 32
    $region21: #{tpu_custom_call.1} parent=1 // pred_fallthru
      _
    %47 = vsyncpa [#allocation3], 1
    %48 = vsyncpa [#allocation4], 1

</llo_original>
